<compile_context>
chip_gen: v5e
topology: v5e:2x2
jax: 0.10.0
libtpu: 0.0.40
codegen_flags: <defaults>
</compile_context>

<pallas_src>
import jax
import jax.numpy as jnp
from jax.experimental import pallas as pl
from jax.experimental.pallas import tpu as pltpu

EPS = 1e-5  # nn.InstanceNorm2d default


# --------------------------------------------------------------------------
# Kernel 1: style affine transform (Linear), executed once, no grid loop.
# --------------------------------------------------------------------------
def style_linear_kernel(style_ref, w_ref, bias_ref, gb_ref):
    """style_ref: (B, S), w_ref: (S, 2C), bias_ref: (1, 2C) -> gb_ref: (B, 2C)."""
    gb = jnp.dot(style_ref[...], w_ref[...], preferred_element_type=jnp.float32)
    gb_ref[...] = (gb + bias_ref[...]).astype(gb_ref.dtype)


# --------------------------------------------------------------------------
# Kernel 2: fused instance-norm + adaptive affine on lane-dense rows.
# --------------------------------------------------------------------------
def adain_norm_kernel(gamma_ref, beta_ref, x_ref, o_ref):
    """gamma/beta: (TR, 1) columns, x/o: (TR, H*W) rows (one row == one (b, c))."""
    x = x_ref[...].astype(jnp.float32)                       # stats in f32
    mean = jnp.mean(x, axis=-1, keepdims=True)               # (TR, 1)
    ex2 = jnp.mean(x * x, axis=-1, keepdims=True)            # (TR, 1)
    var = jnp.maximum(ex2 - mean * mean, 0.0)                 # biased var, clamped
    scale = gamma_ref[...] * jax.lax.rsqrt(var + EPS)         # (TR, 1)
    shift = beta_ref[...] - scale * mean                      # (TR, 1)
    o_ref[...] = (x * scale + shift).astype(o_ref.dtype)      # single fused pass


def _pick_block_rows(total_rows, hw, itemsize, target_bytes=4 * 1024 * 1024):
    """Largest row-tile (multiple of 8) whose (rows x hw) slab fits target_bytes."""
    rows_fit = max(8, (target_bytes // max(1, hw * itemsize)) // 8 * 8)
    if total_rows <= rows_fit:
        return total_rows          # full extent is always a legal block size
    return rows_fit


def adain_forward(x, style, w, bias):
    """x: (B, C, H, W), style: (B, S), w: (2C, S), bias: (2C,)."""
    B, C, H, W = x.shape
    HW = H * W
    total_rows = B * C

    # --- style Linear, computed once (not per grid step) -------------------
    gb = pl.pallas_call(
        style_linear_kernel,
        out_shape=jax.ShapeDtypeStruct((B, 2 * C), jnp.float32),
    )(style, w.T, bias.reshape(1, 2 * C))

    gamma = gb[:, :C].reshape(total_rows, 1)   # (B*C, 1) broadcast columns
    beta = gb[:, C:].reshape(total_rows, 1)

    # --- lane-dense layout: one (b, c) instance per row ---------------------
    x2 = x.reshape(total_rows, HW)

    block_rows = _pick_block_rows(total_rows, HW, x.dtype.itemsize)
    grid = (pl.cdiv(total_rows, block_rows),)

    out2 = pl.pallas_call(
        adain_norm_kernel,
        out_shape=jax.ShapeDtypeStruct((total_rows, HW), x.dtype),
        grid=grid,
        in_specs=[
            pl.BlockSpec((block_rows, 1), lambda i: (i, 0)),    # gamma column
            pl.BlockSpec((block_rows, 1), lambda i: (i, 0)),    # beta column
            pl.BlockSpec((block_rows, HW), lambda i: (i, 0)),   # x rows
        ],
        out_specs=pl.BlockSpec((block_rows, HW), lambda i: (i, 0)),
        compiler_params=pltpu.CompilerParams(
            dimension_semantics=("parallel",),
        ),
    )(gamma, beta, x2)

    return out2.reshape(B, C, H, W)


def adain_reference(x, style, w, bias):
    """Pure-JAX reference matching the PyTorch module."""
    B, C, H, W = x.shape
    gb = style @ w.T + bias                       # (B, 2C)
    gamma = gb[:, :C][:, :, None, None]
    beta = gb[:, C:][:, :, None, None]
    mean = jnp.mean(x, axis=(2, 3), keepdims=True)
    var = jnp.mean((x - mean) ** 2, axis=(2, 3), keepdims=True)
    x_hat = (x - mean) / jnp.sqrt(var + EPS)
    return gamma * x_hat + beta


if __name__ == "__main__":
    B, C, H, W = 2, 4, 16, 16
    STYLE_DIM = 32

    key = jax.random.PRNGKey(0)
    kx, ks, kw = jax.random.split(key, 3)

    x = jax.random.normal(kx, (B, C, H, W), dtype=jnp.float32)
    style = jax.random.normal(ks, (B, STYLE_DIM), dtype=jnp.float32)

    # nn.Linear(style_dim, 2*C): synthetic weight; bias init as in the module __init__
    bound = 1.0 / (STYLE_DIM ** 0.5)
    w = jax.random.uniform(kw, (2 * C, STYLE_DIM), dtype=jnp.float32,
                           minval=-bound, maxval=bound)
    bias = jnp.concatenate([jnp.ones((C,), jnp.float32),
                            jnp.zeros((C,), jnp.float32)])

    out = adain_forward(x, style, w, bias)
    jax.block_until_ready(out)

    ref = adain_reference(x, style, w, bias)
    assert jnp.allclose(out, ref, atol=1e-4, rtol=1e-4), "mismatch vs reference"

    print("KERNEL_OK")
</pallas_src>

<mosaic_0001>
module attributes {stable_mosaic.version = 11 : i64} {
  func.func @style_linear_kernel(%arg0: memref<2x32xf32, #tpu.memory_space<vmem>>, %arg1: memref<32x8xf32, #tpu.memory_space<vmem>>, %arg2: memref<1x8xf32, #tpu.memory_space<vmem>>, %arg3: memref<2x8xf32, #tpu.memory_space<vmem>>) attributes {dimension_semantics = [], scalar_prefetch = 0 : i64, scratch_operands = 0 : i64, tpu.core_type = #tpu.core_type<tc>} {
    %c0 = arith.constant 0 : index
    %c0_0 = arith.constant 0 : index
    %0 = vector.load %arg0[%c0, %c0_0] : memref<2x32xf32, #tpu.memory_space<vmem>>, vector<2x32xf32>
    %c0_1 = arith.constant 0 : index
    %c0_2 = arith.constant 0 : index
    %1 = vector.load %arg1[%c0_1, %c0_2] : memref<32x8xf32, #tpu.memory_space<vmem>>, vector<32x8xf32>
    %cst = arith.constant dense<0.000000e+00> : vector<2x8xf32>
    %2 = tpu.matmul %0, %1, %cst {dimension_numbers = #tpu.dot_dimension_numbers<[1], [0], [0], [1], [0, 0, 1, 1], [], []>} : vector<2x32xf32>, vector<32x8xf32>, vector<2x8xf32> -> vector<2x8xf32>
    %c0_3 = arith.constant 0 : index
    %c0_4 = arith.constant 0 : index
    %3 = vector.load %arg2[%c0_3, %c0_4] : memref<1x8xf32, #tpu.memory_space<vmem>>, vector<1x8xf32>
    %4 = vector.broadcast %3 : vector<1x8xf32> to vector<2x8xf32>
    %5 = arith.addf %2, %4 : vector<2x8xf32>
    %c0_5 = arith.constant 0 : index
    %c0_6 = arith.constant 0 : index
    %6 = vector.load %arg3[%c0_5, %c0_6] : memref<2x8xf32, #tpu.memory_space<vmem>>, vector<2x8xf32>
    tpu.vector_store %arg3[%c0_5, %c0_6], %5 {strides = array<i32>} : memref<2x8xf32, #tpu.memory_space<vmem>>, vector<2x8xf32>,
    return
  }
}

</mosaic_0001>

<llo_original>
// kernel: tpu_custom_call.1
$region0: #{tpu_custom_call.1}
  #allocation0 [shape = 'u32[]', space=smem, size = 0x4, offset = 0x4, fixed_abs, tag = 'smem constant byte address 0x4 - core index']
  #allocation1 [shape = 'u32[72,128]{1,0:T(1,128)}', space=vmem, size = 0x9000, scoped, tag = 'internal scratch']
  %s0 = inlined_call_operand.vmem [shape: f32[2,32], index: 0, kind: input, shape index: {}]
  %s1 = inlined_call_operand.vmem [shape: f32[32,8], index: 1, kind: input, shape index: {}]
  %s2 = inlined_call_operand.vmem [shape: f32[1,8], index: 2, kind: input, shape index: {}]
  %s3 = inlined_call_operand.hbm [shape: f32[2,8], index: 3, kind: output, shape index: {}]
  %s4 = sld [smem:[#allocation0]]
  $region22: #{tpu_custom_call.1} parent=0
    _
  %s6 = ssub.s32 1, %s4
  %s7 = scalar_select 0, %s6, %s4
  $region1: #{tpu_custom_call.1} parent=0
    #allocation2 [shape = 'u8[1024]{0}', space=vmem, size = 0x400, scoped, tag = 'output window, operand 0, single buffered']
    #allocation3 [shape = 's32[1]{0}', space=sflag, size = 0x4, scoped, tag = 'scoped memory for tpu_custom_call.1']
    %8 = vsyncpa [#allocation3], 0
    // Predicated region
    $region2: #{tpu_custom_call.1} parent=1 // pred_check
      _
    $region3: #{tpu_custom_call.1} parent=1 // pred_check_branch
      %10 = sbr.rel (0) target = $region5
    $region4: #{tpu_custom_call.1} parent=1 // pred_region
      _
    $region5: #{tpu_custom_call.1} parent=1 // pred_fallthru
      _
    // Predicated region
    $region6: #{tpu_custom_call.1} parent=1 // pred_check
      _
    $region7: #{tpu_custom_call.1} parent=1 // pred_check_branch
      %12 = sbr.rel (0) target = $region9
    $region8: #{tpu_custom_call.1} parent=1 // pred_region
      _
    $region9: #{tpu_custom_call.1} parent=1 // pred_fallthru
      _
    // Predicated region
    $region10: #{tpu_custom_call.1} parent=1 // pred_check
      _
    $region11: #{tpu_custom_call.1} parent=1 // pred_check_branch
      %14 = sbr.rel (0) target = $region13
    $region12: #{tpu_custom_call.1} parent=1 // pred_region
      _
    $region13: #{tpu_custom_call.1} parent=1 // pred_fallthru
      _
    %v15 = vld [vmem:[%s0] sm:$0x3]
    %v16 = vld [vmem:[%s1] sm:$0xff]
    %v17 = vld [vmem:[%s1 + $0x8] sm:$0xff]
    %v18 = vld [vmem:[%s1 + $0x10] sm:$0xff]
    %v19 = vld [vmem:[%s1 + $0x18] sm:$0xff]
    %v20 = vld [vmem:[%s2] sm:$0x1]
    %v22 = vperm.slane %v20, 0
    %vm24 = vcmask 261120
    %v26 = vsel %vm24, %v15, 0
    %28 = vmatpush.msra.mxu0 0.0
    %29 = vmatpush.msra.mxu0 0.0
    %30 = vmatpush.msra.mxu0 0.0
    %31 = vmatpush.msra.mxu0 0.0
    %32 = vmatpush.msra.mxu0 0.0
    %33 = vmatpush.msra.mxu0 0.0
    %34 = vmatpush.msra.mxu0 0.0
    %35 = vmatpush.msra.mxu0 0.0
    %36 = vmatpush.msra.mxu0 0.0
    %37 = vmatpush.msra.mxu0 0.0
    %38 = vmatpush.msra.mxu0 0.0
    %39 = vmatpush.msra.mxu0 0.0
    %40 = vmatpush.msra.mxu0 %v19
    %41 = vmatpush.msra.mxu0 %v18
    %42 = vmatpush.msra.mxu0 %v17
    %43 = vmatpush.msra.mxu0 %v16
    %44 = vmatmul.f32.gmra.mxu0 %v26
    %v45 = vpop.f32.mrf.mxu0
    %v46 = vadd.f32 %v22, %v45
    %47 = vdwg.mxu0
    %vm48 = vcmask 58368
    %49 = vst.msk [vmem:[#allocation2] sm:$0x3] %vm48, %v46
    // Predicated region
    $region14: #{tpu_custom_call.1} parent=1 // pred_check
      _
    $region15: #{tpu_custom_call.1} parent=1 // pred_check_branch
      %51 = sbr.rel (0) target = $region17
    $region16: #{tpu_custom_call.1} parent=1 // pred_region
      %53 = vsyncadd [#allocation3], 0
      %s55 = sshll.u32 [#allocation2], 4
      %s56 = int_to_ptr.vmem [resolvable:$true] %s55
      %s57 = sshll.u32 %s3, 4
      %s58 = int_to_ptr.hbm [resolvable:$true] %s57
      %60 = dma.vmem_to_hbm [thread:$0]  %s56, 32, %s58, [#allocation3]
    $region17: #{tpu_custom_call.1} parent=1 // pred_fallthru
      _
    // Predicated region
    $region18: #{tpu_custom_call.1} parent=1 // pred_check
      _
    $region19: #{tpu_custom_call.1} parent=1 // pred_check_branch
      %62 = sbr.rel (0) target = $region21
    $region20: #{tpu_custom_call.1} parent=1 // pred_region
      %64 = dma.done [#allocation3], 32
    $region21: #{tpu_custom_call.1} parent=1 // pred_fallthru
      _
    %65 = vsyncpa [#allocation3], 1

</llo_original>
